<compile_context>
chip_gen: v5e
topology: v5e:2x2
jax: 0.10.0
libtpu: 0.0.40
codegen_flags: <defaults>
</compile_context>

<pallas_src>
import jax
import jax.numpy as jnp
from jax.experimental import pallas as pl
from jax.experimental.pallas import tpu as pltpu


_VMEM_LIMIT_BYTES = 32 * 1024 * 1024            # safe scoped-VMEM request on v5e/v6e/v7x
_VMEM_BUDGET_BYTES = (2 * _VMEM_LIMIT_BYTES) // 3  # ~66% of limit reserved for kernel buffers


def _round_up(x: int, m: int) -> int:
    return (x + m - 1) // m * m


def _cdiv(a: int, b: int) -> int:
    return (a + b - 1) // b


# ---------------------------------------------------------------------------
# Kernels
# ---------------------------------------------------------------------------
def _reward_kernel(feat_ref, w_ref, out_ref):
    # feat_ref: [TM, F], w_ref: [F, T_pad] (weight pre-transposed in wrapper),
    # out_ref: [TM, T_pad].  Native [M,K]x[K,N] MXU feed, f32 accumulation.
    out_ref[...] = jnp.dot(
        feat_ref[...], w_ref[...], preferred_element_type=jnp.float32
    ).astype(out_ref.dtype)


def _reward_kernel_ktiled(feat_ref, w_ref, out_ref, acc_ref):
    # feat_ref: [TM, TK], w_ref: [TK, T_pad], acc_ref: [TM, T_pad] f32 scratch.
    k = pl.program_id(1)

    @pl.when(k == 0)
    def _():
        acc_ref[...] = jnp.zeros_like(acc_ref)

    acc_ref[...] += jnp.dot(
        feat_ref[...], w_ref[...], preferred_element_type=jnp.float32
    )

    @pl.when(k == pl.num_programs(1) - 1)
    def _():
        out_ref[...] = acc_ref[...].astype(out_ref.dtype)


# ---------------------------------------------------------------------------
# Tile selection (VMEM-budget aware)
# ---------------------------------------------------------------------------
def _choose_tm_full_f(batch, F, t_pad, feat_isz, w_isz, out_isz, budget):
    """TM for the full-feature-resident path, or None if it cannot fit."""
    # Weight is grid-invariant: we request single-buffering, but budget for
    # two buffers so the fallback (default double-buffer) is still VMEM-safe.
    fixed = 2 * F * t_pad * w_isz
    per_row = 2 * F * feat_isz + 2 * t_pad * out_isz   # feature + output double-buffers
    avail = budget - fixed
    min_rows = batch if batch < 8 else 8
    if avail < per_row * min_rows:
        return None                                    # go K-tiled
    tm_cap = int(avail // per_row)

    if batch <= tm_cap:
        if batch >= 16:
            # >=2 steps so v7x's second TC is used and DMA overlaps compute;
            # ~4 steps on larger batches for deeper pipeline overlap.
            steps = 4 if batch >= 64 else 2
            tm = min(_round_up(_cdiv(batch, steps), 8), (tm_cap // 8) * 8)
        else:
            tm = batch                                 # single tiny tile (block == full dim)
    else:
        # Multiple steps regardless; cap so there are ~>=4 steps.
        tm = min((tm_cap // 8) * 8, max(8, _round_up(_cdiv(batch, 4), 8)))
    return tm


def _choose_tiles_ktiled(batch, F, t_pad, feat_isz, w_isz, out_isz, budget):
    """(TM, TK) for the K-tiled path (feature dim too large to keep resident)."""
    tm = batch if batch < 8 else min(256, max(8, _round_up(_cdiv(batch, 4), 8)))
    tk = 128
    while True:
        fixed = 2 * tm * t_pad * out_isz + tm * t_pad * 4      # out double-buf + f32 acc
        per_k = 2 * tm * feat_isz + 2 * t_pad * w_isz          # streamed bytes per K column
        avail = budget - fixed
        tk = int(avail // per_k) if avail > 0 else 0
        tk = (tk // 128) * 128
        if tk >= 128 or tm <= 8 or tm == batch:
            break
        tm = max(8, tm // 2)
    tk = max(128, tk)
    tk = min(tk, _round_up(F, 128))
    return tm, tk


# ---------------------------------------------------------------------------
# Forward paths
# ---------------------------------------------------------------------------
def _forward_full_f(features, w_t, out_dtype, tm, t_pad, vmem_limit_bytes):
    batch, F = features.shape
    grid = (_cdiv(batch, tm),)

    feat_isz = jnp.dtype(features.dtype).itemsize
    w_isz = jnp.dtype(w_t.dtype).itemsize
    out_isz = jnp.dtype(out_dtype).itemsize
    cost = pl.CostEstimate(
        flops=2 * batch * F * t_pad,
        transcendentals=0,
        bytes_accessed=batch * F * feat_isz            # features read once
        + F * t_pad * w_isz                            # weight read once (resident)
        + batch * t_pad * out_isz,                     # output written once
    )

    def build(weight_spec):
        return pl.pallas_call(
            _reward_kernel,
            out_shape=jax.ShapeDtypeStruct((batch, t_pad), out_dtype),
            grid=grid,
            in_specs=[
                # Feature tiles stream along the batch axis (double-buffered).
                pl.BlockSpec((tm, F), lambda i: (i, 0)),
                weight_spec,
            ],
            out_specs=pl.BlockSpec((tm, t_pad), lambda i: (i, 0)),
            compiler_params=pltpu.CompilerParams(
                dimension_semantics=("parallel",),
                vmem_limit_bytes=vmem_limit_bytes,
            ),
            cost_estimate=cost,
        )

    try:
        # Grid-invariant weight: single-buffer it (saves one F*t_pad VMEM buffer).
        spec = pl.BlockSpec((F, t_pad), lambda i: (0, 0), pipeline_mode=pl.Buffered(1))
        return build(spec)(features, w_t)
    except Exception:
        # Fallback for JAX/Mosaic builds that do not honor pipeline_mode on the
        # TPU pallas_call pipeline; the VMEM budget already assumed two weight
        # buffers so this is still safe.
        spec = pl.BlockSpec((F, t_pad), lambda i: (0, 0))
        return build(spec)(features, w_t)


def _forward_ktiled(features, w_t, out_dtype, tm, tk, t_pad, vmem_limit_bytes):
    batch, F = features.shape
    f_pad = _round_up(F, tk)
    if f_pad != F:
        # Zero-pad K so the ragged last K-block cannot inject undefined values
        # into the accumulator (input OOB regions are not guaranteed zero).
        features = jnp.pad(features, ((0, 0), (0, f_pad - F)))
        w_t = jnp.pad(w_t, ((0, f_pad - F), (0, 0)))

    grid = (_cdiv(batch, tm), f_pad // tk)
    n_m = grid[0]

    feat_isz = jnp.dtype(features.dtype).itemsize
    w_isz = jnp.dtype(w_t.dtype).itemsize
    out_isz = jnp.dtype(out_dtype).itemsize
    cost = pl.CostEstimate(
        flops=2 * batch * f_pad * t_pad,
        transcendentals=0,
        bytes_accessed=batch * f_pad * feat_isz
        + n_m * f_pad * t_pad * w_isz                  # weight re-streamed per M tile
        + batch * t_pad * out_isz,
    )

    return pl.pallas_call(
        _reward_kernel_ktiled,
        out_shape=jax.ShapeDtypeStruct((batch, t_pad), out_dtype),
        grid=grid,
        in_specs=[
            pl.BlockSpec((tm, tk), lambda i, k: (i, k)),
            pl.BlockSpec((tk, t_pad), lambda i, k: (k, 0)),
        ],
        out_specs=pl.BlockSpec((tm, t_pad), lambda i, k: (i, 0)),
        scratch_shapes=[pltpu.VMEM((tm, t_pad), jnp.float32)],
        compiler_params=pltpu.CompilerParams(
            dimension_semantics=("parallel", "arbitrary"),
            vmem_limit_bytes=vmem_limit_bytes,
        ),
        cost_estimate=cost,
    )(features, w_t)


# ---------------------------------------------------------------------------
# Public entry point
# ---------------------------------------------------------------------------
def reward_forward(features: jax.Array, weight: jax.Array) -> jax.Array:
    """Forward pass of Reward.

    Args:
      features: [batch_size, feature_size]  (f32 or bf16; accumulation is f32)
      weight:   [n_task, feature_size]      (torch nn.Linear.weight layout)

    Returns:
      [batch_size, n_task]
    """
    batch, feature_size = features.shape
    n_task, fw = weight.shape
    assert feature_size == fw, "Hidden size doesn't match!"

    out_dtype = features.dtype
    feat_isz = jnp.dtype(features.dtype).itemsize
    w_isz = jnp.dtype(weight.dtype).itemsize
    out_isz = jnp.dtype(out_dtype).itemsize

    # Lane-dense output: pad the task dim to a multiple of 128 so kernel stores
    # are unmasked vst; slice afterwards. Weight is transposed ONCE here so the
    # kernel sees a native [K, N] RHS (no per-step transpose risk).
    t_pad = _round_up(n_task, 128)
    w_t = weight.T
    if t_pad != n_task:
        w_t = jnp.pad(w_t, ((0, 0), (0, t_pad - n_task)))

    tm = _choose_tm_full_f(batch, feature_size, t_pad, feat_isz, w_isz, out_isz,
                           _VMEM_BUDGET_BYTES)
    if tm is not None:
        out = _forward_full_f(features, w_t, out_dtype, tm, t_pad, _VMEM_LIMIT_BYTES)
    else:
        tm, tk = _choose_tiles_ktiled(batch, feature_size, t_pad, feat_isz, w_isz,
                                      out_isz, _VMEM_BUDGET_BYTES)
        out = _forward_ktiled(features, w_t, out_dtype, tm, tk, t_pad, _VMEM_LIMIT_BYTES)

    if t_pad != n_task:
        out = out[:, :n_task]
    return out


if __name__ == "__main__":
    key = jax.random.PRNGKey(0)
    k_feat, k_w, k_feat2, k_feat3 = jax.random.split(key, 4)

    # Small shapes consistent with the module's forward:
    #   features: [batch_size, feature_size] -> output [batch_size, n_task]
    batch_size, feature_size, n_task = 2, 32, 8
    features = jax.random.normal(k_feat, (batch_size, feature_size), dtype=jnp.float32)
    weight = jax.random.normal(k_w, (n_task, feature_size), dtype=jnp.float32) * 0.02

    out = jax.block_until_ready(reward_forward(features, weight))
    ref = features @ weight.T
    assert out.shape == (batch_size, n_task)
    assert jnp.allclose(out, ref, atol=1e-5, rtol=1e-5), "mismatch vs reference (tiny)"

    # Multi-step batch grid (exercises the >=2-step pipelined / megacore path).
    feats2 = jax.random.normal(k_feat2, (48, 256), dtype=jnp.float32)
    w2 = jax.random.normal(k_w, (n_task, 256), dtype=jnp.float32) * 0.02
    out2 = jax.block_until_ready(reward_forward(feats2, w2))
    assert jnp.allclose(out2, feats2 @ w2.T, atol=1e-4, rtol=1e-4), "mismatch (multi-tile)"

    # K-tiled fallback path, exercised directly with small tiles.
    feats3 = jax.random.normal(k_feat3, (16, 256), dtype=jnp.float32)
    w3_t = jnp.pad(w2.T, ((0, 0), (0, 128 - n_task)))    # [256, 128]
    out3 = _forward_ktiled(feats3, w3_t, feats3.dtype, tm=8, tk=128, t_pad=128,
                           vmem_limit_bytes=_VMEM_LIMIT_BYTES)
    out3 = jax.block_until_ready(out3)[:, :n_task]
    assert jnp.allclose(out3, feats3 @ w2.T, atol=1e-4, rtol=1e-4), "mismatch (k-tiled)"

    print("KERNEL_OK")
</pallas_src>

<mosaic_0001>
module attributes {stable_mosaic.version = 11 : i64} {
  func.func @_reward_kernel(%arg0: i32, %arg1: memref<2x32xf32, #tpu.memory_space<vmem>>, %arg2: memref<32x128xf32, #tpu.memory_space<vmem>>, %arg3: memref<2x128xf32, #tpu.memory_space<vmem>>) attributes {dimension_semantics = [#tpu.dimension_semantics<parallel>], iteration_bounds = array<i64: 1>, scalar_prefetch = 0 : i64, scratch_operands = 0 : i64, tpu.core_type = #tpu.core_type<tc>, window_params = [{transform_indices = @transform_0, window_bounds = array<i64: 2, 32>}, {pipeline_mode = #tpu.pipeline_mode<synchronous>, transform_indices = @transform_1, window_bounds = array<i64: 32, 128>}, {transform_indices = @transform_2, window_bounds = array<i64: 2, 128>}]} {
    %c0 = arith.constant 0 : index
    %c0_0 = arith.constant 0 : index
    %0 = vector.load %arg1[%c0, %c0_0] : memref<2x32xf32, #tpu.memory_space<vmem>>, vector<2x32xf32>
    %c0_1 = arith.constant 0 : index
    %c0_2 = arith.constant 0 : index
    %1 = vector.load %arg2[%c0_1, %c0_2] : memref<32x128xf32, #tpu.memory_space<vmem>>, vector<32x128xf32>
    %cst = arith.constant dense<0.000000e+00> : vector<2x128xf32>
    %2 = tpu.matmul %0, %1, %cst {dimension_numbers = #tpu.dot_dimension_numbers<[1], [0], [0], [1], [0, 0, 1, 1], [], []>} : vector<2x32xf32>, vector<32x128xf32>, vector<2x128xf32> -> vector<2x128xf32>
    %c0_3 = arith.constant 0 : index
    %c0_4 = arith.constant 0 : index
    %3 = vector.load %arg3[%c0_3, %c0_4] : memref<2x128xf32, #tpu.memory_space<vmem>>, vector<2x128xf32>
    tpu.vector_store %arg3[%c0_3, %c0_4], %2 {strides = array<i32>} : memref<2x128xf32, #tpu.memory_space<vmem>>, vector<2x128xf32>,
    return
  }
  func.func @transform_0(%arg0: i32) -> (i32, i32) {
    %c0_i32 = arith.constant 0 : i32
    %c0_i32_0 = arith.constant 0 : i32
    return %arg0, %c0_i32 : i32, i32
  }
  func.func @transform_1(%arg0: i32) -> (i32, i32) {
    %c0_i32 = arith.constant 0 : i32
    %c0_i32_0 = arith.constant 0 : i32
    %c0_i32_1 = arith.constant 0 : i32
    return %c0_i32, %c0_i32_0 : i32, i32
  }
  func.func @transform_2(%arg0: i32) -> (i32, i32) {
    %c0_i32 = arith.constant 0 : i32
    %c0_i32_0 = arith.constant 0 : i32
    return %arg0, %c0_i32 : i32, i32
  }
}

module attributes {stable_mosaic.version = 11 : i64} {
  func.func @_reward_kernel(%arg0: i32, %arg1: memref<2x32xf32, #tpu.memory_space<vmem>>, %arg2: memref<32x128xf32, #tpu.memory_space<vmem>>, %arg3: memref<2x128xf32, #tpu.memory_space<vmem>>) attributes {dimension_semantics = [#tpu.dimension_semantics<parallel>], iteration_bounds = array<i64: 1>, scalar_prefetch = 0 : i64, scratch_operands = 0 : i64, tpu.core_type = #tpu.core_type<tc>, window_params = [{transform_indices = @transform_0, window_bounds = array<i64: 2, 32>}, {pipeline_mode = #tpu.pipeline_mode<synchronous>, transform_indices = @transform_1, window_bounds = array<i64: 32, 128>}, {transform_indices = @transform_2, window_bounds = array<i64: 2, 128>}]} {
    %c0 = arith.constant 0 : index
    %c0_0 = arith.constant 0 : index
    %0 = vector.load %arg1[%c0, %c0_0] : memref<2x32xf32, #tpu.memory_space<vmem>>, vector<2x32xf32>
    %c0_1 = arith.constant 0 : index
    %c0_2 = arith.constant 0 : index
    %1 = vector.load %arg2[%c0_1, %c0_2] : memref<32x128xf32, #tpu.memory_space<vmem>>, vector<32x128xf32>
    %cst = arith.constant dense<0.000000e+00> : vector<2x128xf32>
    %2 = tpu.matmul %0, %1, %cst {dimension_numbers = #tpu.dot_dimension_numbers<[1], [0], [0], [1], [0, 0, 1, 1], [], []>} : vector<2x32xf32>, vector<32x128xf32>, vector<2x128xf32> -> vector<2x128xf32>
    %c0_3 = arith.constant 0 : index
    %c0_4 = arith.constant 0 : index
    %3 = vector.load %arg3[%c0_3, %c0_4] : memref<2x128xf32, #tpu.memory_space<vmem>>, vector<2x128xf32>
    tpu.vector_store %arg3[%c0_3, %c0_4], %2 {strides = array<i32>} : memref<2x128xf32, #tpu.memory_space<vmem>>, vector<2x128xf32>,
    return
  }
  func.func @transform_0(%arg0: i32) -> (i32, i32) {
    %c0_i32 = arith.constant 0 : i32
    %c0_i32_0 = arith.constant 0 : i32
    return %arg0, %c0_i32 : i32, i32
  }
  func.func @transform_1(%arg0: i32) -> (i32, i32) {
    %c0_i32 = arith.constant 0 : i32
    %c0_i32_0 = arith.constant 0 : i32
    %c0_i32_1 = arith.constant 0 : i32
    return %c0_i32, %c0_i32_0 : i32, i32
  }
  func.func @transform_2(%arg0: i32) -> (i32, i32) {
    %c0_i32 = arith.constant 0 : i32
    %c0_i32_0 = arith.constant 0 : i32
    return %arg0, %c0_i32 : i32, i32
  }
}

</mosaic_0001>

<llo_original>
// kernel: tpu_custom_call.1
$region0: #{tpu_custom_call.1}
  #allocation0 [shape = 'u32[]', space=smem, size = 0x4, offset = 0x4, fixed_abs, tag = 'smem constant byte address 0x4 - core index']
  #allocation1 [shape = 'u32[72,128]{1,0:T(1,128)}', space=vmem, size = 0x9000, scoped, tag = 'internal scratch']
  %s0 = inlined_call_operand.hbm [shape: f32[2,32], index: 0, kind: input, shape index: {}]
  %s1 = inlined_call_operand.hbm [shape: f32[32,128], index: 1, kind: input, shape index: {}]
  %s2 = inlined_call_operand.hbm [shape: f32[2,128], index: 2, kind: output, shape index: {}]
  %s3 = sld [smem:[#allocation0]]
  $region26: #{tpu_custom_call.1} parent=0
    _
  %s5 = ssub.s32 1, %s3
  %s6 = scalar_select 0, %s5, %s3
  $region1: #{tpu_custom_call.1} parent=0
    #allocation2 [shape = 'u8[1024]{0}', space=vmem, size = 0x400, scoped, tag = 'input window, operand 0, single buffered']
    #allocation3 [shape = 's32[1]{0}', space=sflag, size = 0x4, scoped, tag = 'scoped memory for tpu_custom_call.1']
    #allocation4 [shape = 's32[1]{0}', space=sflag, size = 0x4, scoped, tag = 'scoped memory for tpu_custom_call.1']
    #allocation5 [shape = 'u8[16384]{0}', space=vmem, size = 0x4000, scoped, tag = 'input window, operand 1, single buffered']
    #allocation6 [shape = 's32[1]{0}', space=sflag, size = 0x4, scoped, tag = 'scoped memory for tpu_custom_call.1']
    #allocation7 [shape = 'u8[1024]{0}', space=vmem, size = 0x400, scoped, tag = 'output window, operand 0, single buffered']
    %7 = vsyncpa [#allocation3], 0
    %8 = vsyncpa [#allocation6], 0
    %9 = vsyncpa [#allocation4], 0
    // Predicated region
    $region2: #{tpu_custom_call.1} parent=1 // pred_check
      _
    $region3: #{tpu_custom_call.1} parent=1 // pred_check_branch
      %11 = sbr.rel (0) target = $region5
    $region4: #{tpu_custom_call.1} parent=1 // pred_region
      %13 = vsyncadd [#allocation3], 0
      %s15 = sshll.u32 %s0, 4
      %s16 = int_to_ptr.hbm [resolvable:$true] %s15
      %s17 = sshll.u32 [#allocation2], 4
      %s18 = int_to_ptr.vmem [resolvable:$true] %s17
      %20 = dma.hbm_to_vmem [thread:$0]  %s16, 32, %s18, [#allocation3]
    $region5: #{tpu_custom_call.1} parent=1 // pred_fallthru
      _
    // Predicated region
    $region6: #{tpu_custom_call.1} parent=1 // pred_check
      _
    $region7: #{tpu_custom_call.1} parent=1 // pred_check_branch
      %22 = sbr.rel (0) target = $region9
    $region8: #{tpu_custom_call.1} parent=1 // pred_region
      %24 = vsyncadd [#allocation6], 0
      %s25 = sshll.u32 %s1, 4
      %s26 = int_to_ptr.hbm [resolvable:$true] %s25
      %s27 = sshll.u32 [#allocation5], 4
      %s28 = int_to_ptr.vmem [resolvable:$true] %s27
      %33 = dma.hbm_to_vmem [thread:$0]  %s26, 512, %s28, [#allocation6], 128, 128, 8
    $region9: #{tpu_custom_call.1} parent=1 // pred_fallthru
      _
    // Predicated region
    $region10: #{tpu_custom_call.1} parent=1 // pred_check
      _
    $region11: #{tpu_custom_call.1} parent=1 // pred_check_branch
      %35 = sbr.rel (0) target = $region13
    $region12: #{tpu_custom_call.1} parent=1 // pred_region
      %37 = dma.done [#allocation3], 32
    $region13: #{tpu_custom_call.1} parent=1 // pred_fallthru
      _
    // Predicated region
    $region14: #{tpu_custom_call.1} parent=1 // pred_check
      _
    $region15: #{tpu_custom_call.1} parent=1 // pred_check_branch
      %39 = sbr.rel (0) target = $region17
    $region16: #{tpu_custom_call.1} parent=1 // pred_region
      %41 = dma.done [#allocation6], 512
    $region17: #{tpu_custom_call.1} parent=1 // pred_fallthru
      _
    %v42 = vld [vmem:[#allocation2] sm:$0x3]
    %v43 = vld [vmem:[#allocation5] sm:$0xff]
    %v44 = vld [vmem:[#allocation5 + $0x8] sm:$0xff]
    %v45 = vld [vmem:[#allocation5 + $0x10] sm:$0xff]
    %v46 = vld [vmem:[#allocation5 + $0x18] sm:$0xff]
    %vm47 = vcmask 261120
    %v49 = vsel %vm47, %v42, 0
    %51 = vmatpush.msra.mxu0 0.0
    %52 = vmatpush.msra.mxu0 0.0
    %53 = vmatpush.msra.mxu0 0.0
    %54 = vmatpush.msra.mxu0 0.0
    %55 = vmatpush.msra.mxu0 0.0
    %56 = vmatpush.msra.mxu0 0.0
    %57 = vmatpush.msra.mxu0 0.0
    %58 = vmatpush.msra.mxu0 0.0
    %59 = vmatpush.msra.mxu0 0.0
    %60 = vmatpush.msra.mxu0 0.0
    %61 = vmatpush.msra.mxu0 0.0
    %62 = vmatpush.msra.mxu0 0.0
    %63 = vmatpush.msra.mxu0 %v46
    %64 = vmatpush.msra.mxu0 %v45
    %65 = vmatpush.msra.mxu0 %v44
    %66 = vmatpush.msra.mxu0 %v43
    %67 = vmatmul.f32.gmra.mxu0 %v49
    %v68 = vpop.f32.mrf.mxu0
    %v69 = vadd.f32 0.0, %v68
    %70 = vdwg.mxu0
    %71 = vst [vmem:[#allocation7] sm:$0x3] %v69
    // Predicated region
    $region18: #{tpu_custom_call.1} parent=1 // pred_check
      _
    $region19: #{tpu_custom_call.1} parent=1 // pred_check_branch
      %73 = sbr.rel (0) target = $region21
    $region20: #{tpu_custom_call.1} parent=1 // pred_region
      %75 = vsyncadd [#allocation4], 0
      %s77 = sshll.u32 [#allocation7], 4
      %s78 = int_to_ptr.vmem [resolvable:$true] %s77
      %s79 = sshll.u32 %s2, 4
      %s80 = int_to_ptr.hbm [resolvable:$true] %s79
      %82 = dma.vmem_to_hbm [thread:$0]  %s78, 32, %s80, [#allocation4]
    $region21: #{tpu_custom_call.1} parent=1 // pred_fallthru
      _
    // Predicated region
    $region22: #{tpu_custom_call.1} parent=1 // pred_check
      _
    $region23: #{tpu_custom_call.1} parent=1 // pred_check_branch
      %84 = sbr.rel (0) target = $region25
    $region24: #{tpu_custom_call.1} parent=1 // pred_region
      %86 = dma.done [#allocation4], 32
    $region25: #{tpu_custom_call.1} parent=1 // pred_fallthru
      _
    %87 = vsyncpa [#allocation3], 1
    %88 = vsyncpa [#allocation6], 1
    %89 = vsyncpa [#allocation4], 1

// kernel: tpu_custom_call.1
$region0: #{tpu_custom_call.1}
  #allocation0 [shape = 'u32[]', space=smem, size = 0x4, offset = 0x4, fixed_abs, tag = 'smem constant byte address 0x4 - core index']
  #allocation1 [shape = 'u32[72,128]{1,0:T(1,128)}', space=vmem, size = 0x9000, scoped, tag = 'internal scratch']
  %s0 = inlined_call_operand.hbm [shape: f32[2,32], index: 0, kind: input, shape index: {}]
  %s1 = inlined_call_operand.hbm [shape: f32[32,128], index: 1, kind: input, shape index: {}]
  %s2 = inlined_call_operand.hbm [shape: f32[2,128], index: 2, kind: output, shape index: {}]
  %s3 = sld [smem:[#allocation0]]
  $region26: #{tpu_custom_call.1} parent=0
    _
  %s5 = ssub.s32 1, %s3
  %s6 = scalar_select 0, %s5, %s3
  $region1: #{tpu_custom_call.1} parent=0
    #allocation2 [shape = 'u8[1024]{0}', space=vmem, size = 0x400, scoped, tag = 'input window, operand 0, single buffered']
    #allocation3 [shape = 's32[1]{0}', space=sflag, size = 0x4, scoped, tag = 'scoped memory for tpu_custom_call.1']
    #allocation4 [shape = 's32[1]{0}', space=sflag, size = 0x4, scoped, tag = 'scoped memory for tpu_custom_call.1']
    #allocation5 [shape = 'u8[16384]{0}', space=vmem, size = 0x4000, scoped, tag = 'input window, operand 1, single buffered']
    #allocation6 [shape = 's32[1]{0}', space=sflag, size = 0x4, scoped, tag = 'scoped memory for tpu_custom_call.1']
    #allocation7 [shape = 'u8[1024]{0}', space=vmem, size = 0x400, scoped, tag = 'output window, operand 0, single buffered']
    %7 = vsyncpa [#allocation3], 0
    %8 = vsyncpa [#allocation6], 0
    %9 = vsyncpa [#allocation4], 0
    // Predicated region
    $region2: #{tpu_custom_call.1} parent=1 // pred_check
      _
    $region3: #{tpu_custom_call.1} parent=1 // pred_check_branch
      %11 = sbr.rel (0) target = $region5
    $region4: #{tpu_custom_call.1} parent=1 // pred_region
      %13 = vsyncadd [#allocation3], 0
      %s15 = sshll.u32 %s0, 4
      %s16 = int_to_ptr.hbm [resolvable:$true] %s15
      %s17 = sshll.u32 [#allocation2], 4
      %s18 = int_to_ptr.vmem [resolvable:$true] %s17
      %20 = dma.hbm_to_vmem [thread:$0]  %s16, 32, %s18, [#allocation3]
    $region5: #{tpu_custom_call.1} parent=1 // pred_fallthru
      _
    // Predicated region
    $region6: #{tpu_custom_call.1} parent=1 // pred_check
      _
    $region7: #{tpu_custom_call.1} parent=1 // pred_check_branch
      %22 = sbr.rel (0) target = $region9
    $region8: #{tpu_custom_call.1} parent=1 // pred_region
      %24 = vsyncadd [#allocation6], 0
      %s25 = sshll.u32 %s1, 4
      %s26 = int_to_ptr.hbm [resolvable:$true] %s25
      %s27 = sshll.u32 [#allocation5], 4
      %s28 = int_to_ptr.vmem [resolvable:$true] %s27
      %33 = dma.hbm_to_vmem [thread:$0]  %s26, 512, %s28, [#allocation6], 128, 128, 8
    $region9: #{tpu_custom_call.1} parent=1 // pred_fallthru
      _
    // Predicated region
    $region10: #{tpu_custom_call.1} parent=1 // pred_check
      _
    $region11: #{tpu_custom_call.1} parent=1 // pred_check_branch
      %35 = sbr.rel (0) target = $region13
    $region12: #{tpu_custom_call.1} parent=1 // pred_region
      %37 = dma.done [#allocation3], 32
    $region13: #{tpu_custom_call.1} parent=1 // pred_fallthru
      _
    // Predicated region
    $region14: #{tpu_custom_call.1} parent=1 // pred_check
      _
    $region15: #{tpu_custom_call.1} parent=1 // pred_check_branch
      %39 = sbr.rel (0) target = $region17
    $region16: #{tpu_custom_call.1} parent=1 // pred_region
      %41 = dma.done [#allocation6], 512
    $region17: #{tpu_custom_call.1} parent=1 // pred_fallthru
      _
    %v42 = vld [vmem:[#allocation2] sm:$0x3]
    %v43 = vld [vmem:[#allocation5] sm:$0xff]
    %v44 = vld [vmem:[#allocation5 + $0x8] sm:$0xff]
    %v45 = vld [vmem:[#allocation5 + $0x10] sm:$0xff]
    %v46 = vld [vmem:[#allocation5 + $0x18] sm:$0xff]
    %vm47 = vcmask 261120
    %v49 = vsel %vm47, %v42, 0
    %51 = vmatpush.msra.mxu0 0.0
    %52 = vmatpush.msra.mxu0 0.0
    %53 = vmatpush.msra.mxu0 0.0
    %54 = vmatpush.msra.mxu0 0.0
    %55 = vmatpush.msra.mxu0 0.0
    %56 = vmatpush.msra.mxu0 0.0
    %57 = vmatpush.msra.mxu0 0.0
    %58 = vmatpush.msra.mxu0 0.0
    %59 = vmatpush.msra.mxu0 0.0
    %60 = vmatpush.msra.mxu0 0.0
    %61 = vmatpush.msra.mxu0 0.0
    %62 = vmatpush.msra.mxu0 0.0
    %63 = vmatpush.msra.mxu0 %v46
    %64 = vmatpush.msra.mxu0 %v45
    %65 = vmatpush.msra.mxu0 %v44
    %66 = vmatpush.msra.mxu0 %v43
    %67 = vmatmul.f32.gmra.mxu0 %v49
    %v68 = vpop.f32.mrf.mxu0
    %v69 = vadd.f32 0.0, %v68
    %70 = vdwg.mxu0
    %71 = vst [vmem:[#allocation7] sm:$0x3] %v69
    // Predicated region
    $region18: #{tpu_custom_call.1} parent=1 // pred_check
      _
    $region19: #{tpu_custom_call.1} parent=1 // pred_check_branch
      %73 = sbr.rel (0) target = $region21
    $region20: #{tpu_custom_call.1} parent=1 // pred_region
      %75 = vsyncadd [#allocation4], 0
      %s77 = sshll.u32 [#allocation7], 4
      %s78 = int_to_ptr.vmem [resolvable:$true] %s77
      %s79 = sshll.u32 %s2, 4
      %s80 = int_to_ptr.hbm [resolvable:$true] %s79
      %82 = dma.vmem_to_hbm [thread:$0]  %s78, 32, %s80, [#allocation4]
    $region21: #{tpu_custom_call.1} parent=1 // pred_fallthru
      _
    // Predicated region
    $region22: #{tpu_custom_call.1} parent=1 // pred_check
      _
    $region23: #{tpu_custom_call.1} parent=1 // pred_check_branch
      %84 = sbr.rel (0) target = $region25
    $region24: #{tpu_custom_call.1} parent=1 // pred_region
      %86 = dma.done [#allocation4], 32
    $region25: #{tpu_custom_call.1} parent=1 // pred_fallthru
      _
    %87 = vsyncpa [#allocation3], 1
    %88 = vsyncpa [#allocation6], 1
    %89 = vsyncpa [#allocation4], 1

</llo_original>
